<compile_context>
chip_gen: v6e
topology: v6e:2x2x1
jax: 0.10.0
libtpu: 0.0.40
codegen_flags: <defaults>
</compile_context>

<pallas_src>
import functools

import jax
import jax.numpy as jnp
from jax import lax
from jax.experimental import pallas as pl
from jax.experimental.pallas import tpu as pltpu

_LANES = 128
_DEFAULT_MAX_BLOCK_ROWS = 2048          # 2048 x 128 x f32 = 1 MiB per stream per buffer
_VMEM_LIMIT = 32 * 1024 * 1024


# ---------------------------------------------------------------------------
# Shared elementwise math (f32, in vregs)
# ---------------------------------------------------------------------------
def _blended_math(pred, cov, tgt, w, c_std, k, beta):
    """Returns c_std * smooth_l1_term + (2k) * nll_term, algebraically folded."""
    diff = jnp.abs(pred - tgt)
    if beta > 0.0:
        sl1 = jnp.where(diff < beta, (diff * diff) * (0.5 / beta), diff - 0.5 * beta)
    else:                                   # degenerate smooth-L1 == plain L1
        sl1 = diff
    e = jnp.exp(-cov)                       # EUP; computed exactly once
    if w is None:
        return sl1 * (c_std + k * e) + k * cov
    sl1w = sl1 * w
    # weight_reduce_loss applies the weight a second time to the NLL term;
    # this matches mmdet's forward exactly (intentional, not a bug here).
    return sl1w * (c_std + (k * w) * e) + k * (w * cov)


# ---------------------------------------------------------------------------
# Geometry / lane-dense views
# ---------------------------------------------------------------------------
def _geometry(numel, max_block_rows):
    rows_arr = -(-numel // _LANES)                       # ceil(numel / 128)
    mbr = max(8, (int(max_block_rows) // 8) * 8)
    if rows_arr <= mbr:
        return rows_arr, rows_arr, 1                     # single full-extent block
    n_blocks = -(-rows_arr // mbr)
    return rows_arr, mbr, n_blocks


def _as_rows128(x, rows_arr):
    flat = x.reshape(-1)
    pad = rows_arr * _LANES - flat.shape[0]
    if pad:                                              # only when numel % 128 != 0
        flat = jnp.pad(flat, (0, pad))                   # zeros contribute exactly 0 loss
    return flat.reshape(rows_arr, _LANES)                # zero-copy when pad == 0


# ---------------------------------------------------------------------------
# Jitted forward: builds + launches the pallas_call
# ---------------------------------------------------------------------------
@functools.partial(
    jax.jit,
    static_argnames=("beta", "reduction", "loss_weight", "max_block_rows"))
def _forward(pred, pred_cov, target, weight, attenuated_weight, avg_factor, *,
             beta, reduction, loss_weight, max_block_rows):
    orig_shape = pred.shape
    numel = pred.size
    has_weight = weight is not None
    rows_arr, block_rows, n_blocks = _geometry(numel, max_block_rows)

    tiles = [_as_rows128(pred, rows_arr),
             _as_rows128(pred_cov, rows_arr),
             _as_rows128(target, rows_arr)]
    if has_weight:
        tiles.append(_as_rows128(weight, rows_arr))

    # Fold loss_weight, the attenuated blend and (for 'mean') 1/denominator into two
    # SMEM scalars: blended = coef[0] * std_term + 2*coef[1] * nll_term.
    aw = jnp.asarray(attenuated_weight, jnp.float32)
    lw = jnp.float32(loss_weight)
    c_std = lw * (1.0 - aw)
    c_nll = lw * aw
    if reduction == "mean":
        denom = (jnp.float32(numel) if avg_factor is None
                 else jnp.asarray(avg_factor, jnp.float32))
        c_std = c_std / denom
        c_nll = c_nll / denom
    coef = jnp.stack([c_std, 0.5 * c_nll]).astype(jnp.float32)

    smem_spec = pl.BlockSpec(memory_space=pltpu.MemorySpace.SMEM)

    def load_f32(pred_ref, cov_ref, tgt_ref, w_ref):
        p = pred_ref[...].astype(jnp.float32)
        c = jnp.clip(cov_ref[...].astype(jnp.float32), -7.0, 7.0)
        t = tgt_ref[...].astype(jnp.float32)
        w = None if w_ref is None else w_ref[...].astype(jnp.float32)
        return p, c, t, w

    # ---------------- reduction == 'none': elementwise, lane-dense output ----------
    if reduction == "none":
        dtypes = [pred.dtype, pred_cov.dtype, target.dtype]
        if has_weight:
            dtypes.append(weight.dtype)
        out_dtype = jnp.result_type(*dtypes)

        def elem_kernel(coef_ref, pred_ref, cov_ref, tgt_ref, *rest):
            if has_weight:
                w_ref, out_ref = rest
            else:
                w_ref, (out_ref,) = None, rest
            p, c, t, w = load_f32(pred_ref, cov_ref, tgt_ref, w_ref)
            out_ref[...] = _blended_math(
                p, c, t, w, coef_ref[0], coef_ref[1], beta).astype(out_ref.dtype)

        tile_spec = pl.BlockSpec((block_rows, _LANES), lambda i: (i, 0))
        out2d = pl.pallas_call(
            elem_kernel,
            out_shape=jax.ShapeDtypeStruct((rows_arr, _LANES), out_dtype),
            grid=(n_blocks,),
            in_specs=[smem_spec] + [tile_spec] * len(tiles),
            out_specs=pl.BlockSpec((block_rows, _LANES), lambda i: (i, 0)),
            compiler_params=pltpu.CompilerParams(
                dimension_semantics=("parallel",),
                vmem_limit_bytes=_VMEM_LIMIT),
        )(coef, *tiles)
        if numel == rows_arr * _LANES:               # aligned: zero-copy un-view
            return out2d.reshape(orig_shape)
        # TODO(synk): the unaligned-numel 'none' path still pays one XLA slice copy;
        # a masked tail store into an exactly-sized flat buffer would remove it.
        return out2d.reshape(-1)[:numel].reshape(orig_shape)

    # ---------------- reduction == 'mean' / 'sum': resident vector accumulator -----
    n_cores = 2 if n_blocks >= 2 else 1              # split reduction across v7x TCs
    blk_per_core = -(-n_blocks // n_cores)
    phantom = n_cores * blk_per_core > n_blocks      # odd block count -> 1 redundant blk
    needs_mask = (rows_arr % block_rows != 0) or phantom
    acc_rows = 8 if block_rows % 8 == 0 else block_rows
    fold = block_rows // acc_rows

    def block_index(c, i):
        blk = c * blk_per_core + i
        if phantom:
            blk = jnp.minimum(blk, n_blocks - 1)     # phantom re-reads last block; masked
        return (blk, 0)

    def sum_kernel(coef_ref, pred_ref, cov_ref, tgt_ref, *rest):
        if has_weight:
            w_ref, out_ref = rest
        else:
            w_ref, (out_ref,) = None, rest
        i = pl.program_id(1)

        @pl.when(i == 0)
        def _init():
            out_ref[...] = jnp.zeros_like(out_ref)

        p, c, t, w = load_f32(pred_ref, cov_ref, tgt_ref, w_ref)
        blended = _blended_math(p, c, t, w, coef_ref[0], coef_ref[1], beta)
        if needs_mask:
            # Zero garbage rows of the ragged edge / phantom block BEFORE summing.
            # A select is used, so stale NaN/Inf in masked rows cannot propagate.
            limit = rows_arr - (pl.program_id(0) * blk_per_core + i) * block_rows
            ridx = lax.broadcasted_iota(jnp.int32, (block_rows, _LANES), 0)
            blended = jnp.where(ridx < limit, blended, 0.0)
        if fold > 1:                                  # tile-aligned fold -> plain vadds
            blended = blended.reshape(fold, acc_rows, _LANES).sum(axis=0)
        out_ref[...] += blended                       # per-core resident f32 accumulator

    tile_spec = pl.BlockSpec((block_rows, _LANES), block_index)
    parts = pl.pallas_call(
        sum_kernel,
        out_shape=jax.ShapeDtypeStruct((n_cores * acc_rows, _LANES), jnp.float32),
        grid=(n_cores, blk_per_core),
        in_specs=[smem_spec] + [tile_spec] * len(tiles),
        out_specs=pl.BlockSpec((acc_rows, _LANES), lambda c, i: (c, 0)),
        compiler_params=pltpu.CompilerParams(
            dimension_semantics=("parallel", "arbitrary"),
            vmem_limit_bytes=_VMEM_LIMIT),
    )(coef, *tiles)
    return jnp.sum(parts)                             # tiny (<=16,128) reduce in XLA


# ---------------------------------------------------------------------------
# Module
# ---------------------------------------------------------------------------
class SmoothL1WithNLL:
    """JAX/Pallas port of mmdet SmoothL1WithNLL (forward pass, no parameters)."""

    def __init__(self, beta=1.0, reduction='mean', covariance_type='diagonal',
                 attenuated=True, loss_weight=1.0,
                 max_block_rows=_DEFAULT_MAX_BLOCK_ROWS):
        self.beta = float(beta)
        self.reduction = reduction
        self.loss_weight = float(loss_weight)
        self.covariance_type = covariance_type   # stored; unused in forward (as in spec)
        self.attenuated = attenuated             # stored; unused in forward (as in spec)
        self.max_block_rows = int(max_block_rows)

    def __call__(self, pred, pred_cov, target, attenuated_weight=1.0,
                 weight=None, avg_factor=None, reduction_override=None):
        assert reduction_override in (None, 'none', 'mean', 'sum')
        reduction = reduction_override if reduction_override else self.reduction
        if reduction == 'sum' and avg_factor is not None:
            raise ValueError('avg_factor can not be used with reduction="sum"')
        # TODO(synk): the original mmdet forward never threads self.beta into
        # smooth_l1_loss (it relies on the function default beta=1.0); we use
        # self.beta, which is identical for the default configuration.
        af = None if avg_factor is None else jnp.asarray(avg_factor, jnp.float32)
        return _forward(pred, pred_cov, target, weight,
                        jnp.asarray(attenuated_weight, jnp.float32), af,
                        beta=self.beta, reduction=reduction,
                        loss_weight=self.loss_weight,
                        max_block_rows=self.max_block_rows)


# ---------------------------------------------------------------------------
# Pure-JAX reference (mirrors the PyTorch spec) + self-check
# ---------------------------------------------------------------------------
def _reference(pred, pred_cov, target, weight, attenuated_weight, reduction,
               avg_factor, loss_weight, beta):
    pred = pred.astype(jnp.float32)
    cov = jnp.clip(pred_cov.astype(jnp.float32), -7.0, 7.0)
    target = target.astype(jnp.float32)
    diff = jnp.abs(pred - target)
    if beta > 0:
        sl1 = jnp.where(diff < beta, 0.5 * diff * diff / beta, diff - 0.5 * beta)
    else:
        sl1 = diff
    w = None if weight is None else weight.astype(jnp.float32)
    std_elem = sl1 if w is None else sl1 * w
    nll_elem = 0.5 * jnp.exp(-cov) * std_elem + 0.5 * cov
    if w is not None:
        nll_elem = nll_elem * w

    def reduce(x):
        if reduction == 'mean':
            return jnp.sum(x) / (x.size if avg_factor is None else avg_factor)
        if reduction == 'sum':
            return jnp.sum(x)
        return x

    blended = ((1.0 - attenuated_weight) * reduce(std_elem)
               + attenuated_weight * reduce(nll_elem))
    return loss_weight * blended


if __name__ == "__main__":
    key = jax.random.PRNGKey(0)
    k1, k2, k3, k4 = jax.random.split(key, 4)

    N, D = 256, 4                          # 256 boxes x 4 bbox-delta coords (aligned)
    pred = jax.random.normal(k1, (N, D), dtype=jnp.float32)
    pred_cov = 3.0 * jax.random.normal(k2, (N, D), dtype=jnp.float32)
    target = jax.random.normal(k3, (N, D), dtype=jnp.float32)
    weight = jax.random.uniform(k4, (N, D), dtype=jnp.float32)

    loss_mod = SmoothL1WithNLL(reduction='mean', loss_weight=1.0)

    def check(got, want, rtol=1e-5, atol=1e-5):
        got = jax.block_until_ready(got)
        assert bool(jnp.all(jnp.isfinite(got))), "non-finite loss"
        assert bool(jnp.allclose(got, want, rtol=rtol, atol=atol)), (got, want)

    # 1) default attenuated_weight=1.0, 'mean', with weight
    check(loss_mod(pred, pred_cov, target, attenuated_weight=1.0, weight=weight),
          _reference(pred, pred_cov, target, weight, 1.0, 'mean', None, 1.0, 1.0))

    # 2) blended attenuated_weight + avg_factor ('mean')
    check(loss_mod(pred, pred_cov, target, attenuated_weight=0.3, weight=weight,
                   avg_factor=123.0),
          _reference(pred, pred_cov, target, weight, 0.3, 'mean', 123.0, 1.0, 1.0))

    # 3) reduction='none' (zero-copy lane-dense output)
    check(loss_mod(pred, pred_cov, target, attenuated_weight=0.5, weight=weight,
                   reduction_override='none'),
          _reference(pred, pred_cov, target, weight, 0.5, 'none', None, 1.0, 1.0))

    # 4) reduction='sum', weight=None (specialized kernel: no ones-array DMA)
    check(loss_mod(pred, pred_cov, target, attenuated_weight=0.7,
                   reduction_override='sum'),
          _reference(pred, pred_cov, target, None, 0.7, 'sum', None, 1.0, 1.0))

    # 5) bf16 inputs stay bf16 on the wire (cast to f32 in-kernel)
    check(loss_mod(pred.astype(jnp.bfloat16), pred_cov.astype(jnp.bfloat16),
                   target.astype(jnp.bfloat16), attenuated_weight=0.5,
                   weight=weight.astype(jnp.bfloat16)),
          _reference(pred.astype(jnp.bfloat16), pred_cov.astype(jnp.bfloat16),
                     target.astype(jnp.bfloat16), weight.astype(jnp.bfloat16),
                     0.5, 'mean', None, 1.0, 1.0),
          rtol=1e-4, atol=1e-4)

    # 6) multi-block grid: 2-core split, ragged edge block + phantom block masking
    loss_small_tiles = SmoothL1WithNLL(reduction='mean', loss_weight=2.0,
                                       max_block_rows=8)
    N2 = 640                               # 2560 elems -> 20 rows, block=8 -> 3 blocks
    p2 = jax.random.normal(k1, (N2, D), dtype=jnp.float32)
    c2 = jax.random.normal(k2, (N2, D), dtype=jnp.float32)
    t2 = jax.random.normal(k3, (N2, D), dtype=jnp.float32)
    w2 = jax.random.uniform(k4, (N2, D), dtype=jnp.float32)
    check(loss_small_tiles(p2, c2, t2, attenuated_weight=0.25, weight=w2),
          _reference(p2, c2, t2, w2, 0.25, 'mean', None, 2.0, 1.0))
    check(loss_small_tiles(p2, c2, t2, attenuated_weight=0.25, weight=w2,
                           reduction_override='none'),
          _reference(p2, c2, t2, w2, 0.25, 'none', None, 2.0, 1.0))

    # 7) numel not a multiple of 128 (padded path)
    N3 = 1000                              # 4000 elems -> padded to 32 rows
    p3 = jax.random.normal(k1, (N3, D), dtype=jnp.float32)
    c3 = jax.random.normal(k2, (N3, D), dtype=jnp.float32)
    t3 = jax.random.normal(k3, (N3, D), dtype=jnp.float32)
    w3 = jax.random.uniform(k4, (N3, D), dtype=jnp.float32)
    check(loss_mod(p3, c3, t3, attenuated_weight=0.6, weight=w3),
          _reference(p3, c3, t3, w3, 0.6, 'mean', None, 1.0, 1.0))
    check(loss_mod(p3, c3, t3, attenuated_weight=0.6, weight=w3,
                   reduction_override='none'),
          _reference(p3, c3, t3, w3, 0.6, 'none', None, 1.0, 1.0))

    # 8) tiny input whose row count is not a multiple of 8 (full-extent block)
    N4 = 37                                # 148 elems -> 2 rows
    p4 = jax.random.normal(k1, (N4, D), dtype=jnp.float32)
    c4 = jax.random.normal(k2, (N4, D), dtype=jnp.float32)
    t4 = jax.random.normal(k3, (N4, D), dtype=jnp.float32)
    check(loss_mod(p4, c4, t4, attenuated_weight=0.4, reduction_override='sum'),
          _reference(p4, c4, t4, None, 0.4, 'sum', None, 1.0, 1.0))

    print("KERNEL_OK")
</pallas_src>

<mosaic_0001>
module attributes {stable_mosaic.version = 11 : i64} {
  func.func @sum_kernel(%arg0: i32, %arg1: i32, %arg2: memref<2xf32, #tpu.memory_space<smem>>, %arg3: memref<8x128xf32, #tpu.memory_space<vmem>>, %arg4: memref<8x128xf32, #tpu.memory_space<vmem>>, %arg5: memref<8x128xf32, #tpu.memory_space<vmem>>, %arg6: memref<8x128xf32, #tpu.memory_space<vmem>>, %arg7: memref<8x128xf32, #tpu.memory_space<vmem>>) attributes {dimension_semantics = [#tpu.dimension_semantics<parallel>, #tpu.dimension_semantics<arbitrary>], iteration_bounds = array<i64: 1, 1>, scalar_prefetch = 0 : i64, scratch_operands = 0 : i64, tpu.core_type = #tpu.core_type<tc>, window_params = [{transform_indices = @transform_0, window_bounds = array<i64: 2>}, {transform_indices = @transform_1, window_bounds = array<i64: 8, 128>}, {transform_indices = @transform_2, window_bounds = array<i64: 8, 128>}, {transform_indices = @transform_3, window_bounds = array<i64: 8, 128>}, {transform_indices = @transform_4, window_bounds = array<i64: 8, 128>}, {transform_indices = @transform_5, window_bounds = array<i64: 8, 128>}]} {
    %c0_i32 = arith.constant 0 : i32
    %0 = arith.cmpi eq, %arg1, %c0_i32 : i32
    %1 = arith.extui %0 : i1 to i32
    %c0_i32_0 = arith.constant 0 : i32
    %2 = arith.cmpi ne, %1, %c0_i32_0 : i32
    scf.if %2 {
      %cst_18 = arith.constant 0.000000e+00 : f32
      %40 = vector.broadcast %cst_18 : f32 to vector<8x128xf32>
      %c0_19 = arith.constant 0 : index
      %c0_20 = arith.constant 0 : index
      %41 = vector.load %arg7[%c0_19, %c0_20] : memref<8x128xf32, #tpu.memory_space<vmem>>, vector<8x128xf32>
      tpu.vector_store %arg7[%c0_19, %c0_20], %40 {strides = array<i32>} : memref<8x128xf32, #tpu.memory_space<vmem>>, vector<8x128xf32>,
    } else {
    }
    %c0 = arith.constant 0 : index
    %c0_1 = arith.constant 0 : index
    %3 = vector.load %arg3[%c0, %c0_1] : memref<8x128xf32, #tpu.memory_space<vmem>>, vector<8x128xf32>
    %c0_2 = arith.constant 0 : index
    %c0_3 = arith.constant 0 : index
    %4 = vector.load %arg4[%c0_2, %c0_3] : memref<8x128xf32, #tpu.memory_space<vmem>>, vector<8x128xf32>
    %cst = arith.constant -7.000000e+00 : f32
    %cst_4 = arith.constant 7.000000e+00 : f32
    %5 = vector.broadcast %cst : f32 to vector<8x128xf32>
    %6 = arith.maximumf %5, %4 : vector<8x128xf32>
    %7 = vector.broadcast %cst_4 : f32 to vector<8x128xf32>
    %8 = arith.minimumf %7, %6 : vector<8x128xf32>
    %c0_5 = arith.constant 0 : index
    %c0_6 = arith.constant 0 : index
    %9 = vector.load %arg5[%c0_5, %c0_6] : memref<8x128xf32, #tpu.memory_space<vmem>>, vector<8x128xf32>
    %c0_7 = arith.constant 0 : index
    %c0_8 = arith.constant 0 : index
    %10 = vector.load %arg6[%c0_7, %c0_8] : memref<8x128xf32, #tpu.memory_space<vmem>>, vector<8x128xf32>
    %c0_9 = arith.constant 0 : index
    %11 = memref.load %arg2[%c0_9] : memref<2xf32, #tpu.memory_space<smem>>
    %c1 = arith.constant 1 : index
    %12 = memref.load %arg2[%c1] : memref<2xf32, #tpu.memory_space<smem>>
    %13 = arith.subf %3, %9 : vector<8x128xf32>
    %14 = math.absf %13 : vector<8x128xf32>
    %cst_10 = arith.constant 1.000000e+00 : f32
    %15 = vector.broadcast %cst_10 : f32 to vector<8x128xf32>
    %16 = arith.cmpf olt, %14, %15 : vector<8x128xf32>
    %17 = arith.mulf %14, %14 : vector<8x128xf32>
    %cst_11 = arith.constant 5.000000e-01 : f32
    %18 = vector.broadcast %cst_11 : f32 to vector<8x128xf32>
    %19 = arith.mulf %17, %18 : vector<8x128xf32>
    %cst_12 = arith.constant 5.000000e-01 : f32
    %20 = vector.broadcast %cst_12 : f32 to vector<8x128xf32>
    %21 = arith.subf %14, %20 : vector<8x128xf32>
    %22 = arith.select %16, %19, %21 : vector<8x128xi1>, vector<8x128xf32>
    %cst_13 = arith.constant 0.000000e+00 : f32
    %23 = vector.broadcast %cst_13 : f32 to vector<8x128xf32>
    %24 = arith.subf %23, %8 : vector<8x128xf32>
    %25 = math.exp %24 : vector<8x128xf32>
    %26 = arith.mulf %22, %10 : vector<8x128xf32>
    %27 = vector.broadcast %12 : f32 to vector<8x128xf32>
    %28 = arith.mulf %27, %10 : vector<8x128xf32>
    %29 = arith.mulf %28, %25 : vector<8x128xf32>
    %30 = vector.broadcast %11 : f32 to vector<8x128xf32>
    %31 = arith.addf %30, %29 : vector<8x128xf32>
    %32 = arith.mulf %26, %31 : vector<8x128xf32>
    %33 = arith.mulf %10, %8 : vector<8x128xf32>
    %34 = vector.broadcast %12 : f32 to vector<8x128xf32>
    %35 = arith.mulf %34, %33 : vector<8x128xf32>
    %36 = arith.addf %32, %35 : vector<8x128xf32>
    %c0_14 = arith.constant 0 : index
    %c0_15 = arith.constant 0 : index
    %37 = vector.load %arg7[%c0_14, %c0_15] : memref<8x128xf32, #tpu.memory_space<vmem>>, vector<8x128xf32>
    %38 = arith.addf %37, %36 : vector<8x128xf32>
    %c0_16 = arith.constant 0 : index
    %c0_17 = arith.constant 0 : index
    %39 = vector.load %arg7[%c0_16, %c0_17] : memref<8x128xf32, #tpu.memory_space<vmem>>, vector<8x128xf32>
    tpu.vector_store %arg7[%c0_16, %c0_17], %38 {strides = array<i32>} : memref<8x128xf32, #tpu.memory_space<vmem>>, vector<8x128xf32>,
    return
  }
  func.func @transform_0(%arg0: i32, %arg1: i32) -> i32 {
    %c0_i32 = arith.constant 0 : i32
    %c0_i32_0 = arith.constant 0 : i32
    return %c0_i32 : i32
  }
  func.func @transform_1(%arg0: i32, %arg1: i32) -> (i32, i32) {
    %c1_i32 = arith.constant 1 : i32
    %0 = arith.muli %arg0, %c1_i32 : i32
    %1 = arith.addi %0, %arg1 : i32
    %c0_i32 = arith.constant 0 : i32
    %c0_i32_0 = arith.constant 0 : i32
    return %1, %c0_i32 : i32, i32
  }
  func.func @transform_2(%arg0: i32, %arg1: i32) -> (i32, i32) {
    %c1_i32 = arith.constant 1 : i32
    %0 = arith.muli %arg0, %c1_i32 : i32
    %1 = arith.addi %0, %arg1 : i32
    %c0_i32 = arith.constant 0 : i32
    %c0_i32_0 = arith.constant 0 : i32
    return %1, %c0_i32 : i32, i32
  }
  func.func @transform_3(%arg0: i32, %arg1: i32) -> (i32, i32) {
    %c1_i32 = arith.constant 1 : i32
    %0 = arith.muli %arg0, %c1_i32 : i32
    %1 = arith.addi %0, %arg1 : i32
    %c0_i32 = arith.constant 0 : i32
    %c0_i32_0 = arith.constant 0 : i32
    return %1, %c0_i32 : i32, i32
  }
  func.func @transform_4(%arg0: i32, %arg1: i32) -> (i32, i32) {
    %c1_i32 = arith.constant 1 : i32
    %0 = arith.muli %arg0, %c1_i32 : i32
    %1 = arith.addi %0, %arg1 : i32
    %c0_i32 = arith.constant 0 : i32
    %c0_i32_0 = arith.constant 0 : i32
    return %1, %c0_i32 : i32, i32
  }
  func.func @transform_5(%arg0: i32, %arg1: i32) -> (i32, i32) {
    %c0_i32 = arith.constant 0 : i32
    %c0_i32_0 = arith.constant 0 : i32
    return %arg0, %c0_i32 : i32, i32
  }
}

</mosaic_0001>

<llo_original>
// kernel: _forward.1
$region0: #{_forward.1}
  #allocation0 [shape = 'u32[]', space=smem, size = 0x4, offset = 0x4, fixed_abs, tag = 'smem constant byte address 0x4 - core index']
  #allocation1 [shape = 'u32[144,128]{1,0:T(1,128)}', space=vmem, size = 0x12000, scoped, tag = 'internal scratch']
  %s0 = inlined_call_operand.vmem [shape: f32[2], index: 0, kind: input, shape index: {}]
  %s1 = inlined_call_operand.vmem [shape: f32[8,128], index: 1, kind: input, shape index: {}]
  %s2 = inlined_call_operand.vmem [shape: f32[8,128], index: 2, kind: input, shape index: {}]
  %s3 = inlined_call_operand.vmem [shape: f32[8,128], index: 3, kind: input, shape index: {}]
  %s4 = inlined_call_operand.vmem [shape: f32[8,128], index: 4, kind: input, shape index: {}]
  %s5 = inlined_call_operand.vmem [shape: f32[8,128], index: 5, kind: output, shape index: {}]
  %s6 = sld [smem:[#allocation0]]
  $region38: #{_forward.1} parent=0
    _
  %s8 = ssub.s32 1, %s6
  %s9 = scalar_select 0, %s8, %s6
  $region1: #{_forward.1} parent=0
    #allocation2 [shape = 'u8[512]{0}', space=smem, size = 0x200, scoped, tag = 'input window, operand 0, single buffered']
    #allocation3 [shape = 's32[1]{0}', space=sflag, size = 0x4, scoped, tag = 'scoped memory for _forward.1']
    %10 = vsyncpa [#allocation3], 0
    // Predicated region
    $region2: #{_forward.1} parent=1 // pred_check
      _
    $region3: #{_forward.1} parent=1 // pred_check_branch
      %12 = sbr.rel (0) target = $region5
    $region4: #{_forward.1} parent=1 // pred_region
      %s14 = ssub.s32 16, 16
      %15 = vsyncadd [#allocation3], %s14
      %s17 = sshll.u32 %s0, 4
      %s18 = int_to_ptr.vmem [resolvable:$true] %s17
      %20 = dma.vmem_to_smem %s18, 16, [#allocation2], [#allocation3]
    $region5: #{_forward.1} parent=1 // pred_fallthru
      _
    // Predicated region
    $region6: #{_forward.1} parent=1 // pred_check
      _
    $region7: #{_forward.1} parent=1 // pred_check_branch
      %22 = sbr.rel (0) target = $region9
    $region8: #{_forward.1} parent=1 // pred_region
      %s23 = sadd.s32 0, 0
      %p24 = scmp.lt.s32.totalorder %s23, 0
      %s25 = scalar_select %p24, %s23, 0
      %s26 = smul.addr %s25, 8
      %s27 = scalar_lea.vmem %s1, %s26
      %s28 = sadd.s32 0, 0
    $region9: #{_forward.1} parent=1 // pred_fallthru
      _
    // Predicated region
    $region10: #{_forward.1} parent=1 // pred_check
      _
    $region11: #{_forward.1} parent=1 // pred_check_branch
      %30 = sbr.rel (0) target = $region13
    $region12: #{_forward.1} parent=1 // pred_region
      %s31 = sadd.s32 0, 0
      %p32 = scmp.lt.s32.totalorder %s31, 0
      %s33 = scalar_select %p32, %s31, 0
      %s34 = smul.addr %s33, 8
      %s35 = scalar_lea.vmem %s2, %s34
      %s36 = sadd.s32 0, 0
    $region13: #{_forward.1} parent=1 // pred_fallthru
      _
    // Predicated region
    $region14: #{_forward.1} parent=1 // pred_check
      _
    $region15: #{_forward.1} parent=1 // pred_check_branch
      %38 = sbr.rel (0) target = $region17
    $region16: #{_forward.1} parent=1 // pred_region
      %s39 = sadd.s32 0, 0
      %p40 = scmp.lt.s32.totalorder %s39, 0
      %s41 = scalar_select %p40, %s39, 0
      %s42 = smul.addr %s41, 8
      %s43 = scalar_lea.vmem %s3, %s42
      %s44 = sadd.s32 0, 0
    $region17: #{_forward.1} parent=1 // pred_fallthru
      _
    // Predicated region
    $region18: #{_forward.1} parent=1 // pred_check
      _
    $region19: #{_forward.1} parent=1 // pred_check_branch
      %46 = sbr.rel (0) target = $region21
    $region20: #{_forward.1} parent=1 // pred_region
      %s47 = sadd.s32 0, 0
      %p48 = scmp.lt.s32.totalorder %s47, 0
      %s49 = scalar_select %p48, %s47, 0
      %s50 = smul.addr %s49, 8
      %s51 = scalar_lea.vmem %s4, %s50
      %s52 = sadd.s32 0, 0
    $region21: #{_forward.1} parent=1 // pred_fallthru
      _
    // Predicated region
    $region22: #{_forward.1} parent=1 // pred_check
      _
    $region23: #{_forward.1} parent=1 // pred_check_branch
      %54 = sbr.rel (0) target = $region25
    $region24: #{_forward.1} parent=1 // pred_region
      %55 = dma.done [#allocation3], 16
    $region25: #{_forward.1} parent=1 // pred_fallthru
      _
    %56 = sfence
    %s57 = sadd.s32 0, 0
    %p58 = scmp.lt.s32.totalorder %s57, 0
    %s59 = scalar_select %p58, %s57, 0
    %s60 = smul.addr %s59, 8
    %s61 = scalar_lea.vmem %s1, %s60
    %s62 = sadd.s32 0, 0
    %p63 = scmp.lt.s32.totalorder %s62, 0
    %s64 = scalar_select %p63, %s62, 0
    %s65 = smul.addr %s64, 8
    %s66 = scalar_lea.vmem %s2, %s65
    %s67 = sadd.s32 0, 0
    %p68 = scmp.lt.s32.totalorder %s67, 0
    %s69 = scalar_select %p68, %s67, 0
    %s70 = smul.addr %s69, 8
    %s71 = scalar_lea.vmem %s3, %s70
    %s72 = sadd.s32 0, 0
    %p73 = scmp.lt.s32.totalorder %s72, 0
    %s74 = scalar_select %p73, %s72, 0
    %s75 = smul.addr %s74, 8
    %s76 = scalar_lea.vmem %s4, %s75
    %s77 = sadd.s32 0, 0
    %p78 = scmp.lt.s32.totalorder %s77, 0
    %s79 = scalar_select %p78, %s77, 0
    %s80 = smul.addr %s79, 8
    %s81 = scalar_lea.vmem %s1, %s80
    %s82 = sadd.s32 0, 0
    %s83 = sadd.s32 0, 0
    %p84 = scmp.lt.s32.totalorder %s83, 0
    %s85 = scalar_select %p84, %s83, 0
    %s86 = smul.addr %s85, 8
    %s87 = scalar_lea.vmem %s2, %s86
    %s88 = sadd.s32 0, 0
    %s89 = sadd.s32 0, 0
    %p90 = scmp.lt.s32.totalorder %s89, 0
    %s91 = scalar_select %p90, %s89, 0
    %s92 = smul.addr %s91, 8
    %s93 = scalar_lea.vmem %s3, %s92
    %s94 = sadd.s32 0, 0
    %s95 = sadd.s32 0, 0
    %p96 = scmp.lt.s32.totalorder %s95, 0
    %s97 = scalar_select %p96, %s95, 0
    %s98 = smul.addr %s97, 8
    %s99 = scalar_lea.vmem %s4, %s98
    %s100 = sadd.s32 0, 0
    %p101 = scmp.eq.s32.totalorder 0, 0
    // Predicated region
    $region26: #{_forward.1} parent=1 // pred_check
      %p102 = pneg %p101
    $region27: #{_forward.1} parent=1 // pred_check_branch
      %104 = sbr.rel (%p102) target = $region29
    $region28: #{_forward.1} parent=1 // pred_region
      %105 = vst [vmem:[%s5] sm:$0xff] 0.0
    $region29: #{_forward.1} parent=1 // pred_fallthru
      _
    %v106 = vld [vmem:[%s81] sm:$0xff]
    %v107 = vld [vmem:[%s87] sm:$0xff]
    %v108 = vmax.f32 %v107, -7.0
    %v109 = vmin.f32 %v108, 7.0
    %v110 = vld [vmem:[%s93] sm:$0xff]
    %v111 = vld [vmem:[%s99] sm:$0xff]
    %s112 = sld [smem:[#allocation2]]
    %s113 = sld [smem:[#allocation2 + $0x1]]
    %v114 = vsub.f32 %v106, %v110
    %v115 = vand.u32 2147483647, %v114
    %vm116 = vcmp.lt.f32.partialorder %v115, 1.0
    %v117 = vmul.f32 %v115, %v115
    %v118 = vmul.f32 %v117, 0.5
    %v119 = vsub.f32 %v115, 0.5
    %v120 = vsel %vm116, %v118, %v119
    %v121 = vsub.f32 0.0, %v109
    %v122 = vmul.f32 %v121, 1.442695
    %v123 = vpow.pop %v122
    %v124 = vmul.f32 %v120, %v111
    %v125 = vstv %s113
    %v126 = vmul.f32 %v125, %v111
    %v127 = vmul.f32 %v126, %v123
    %v128 = vstv %s112
    %v129 = vadd.f32 %v128, %v127
    %v130 = vmul.f32 %v124, %v129
    %v131 = vmul.f32 %v111, %v109
    %v132 = vmul.f32 %v125, %v131
    %v133 = vadd.f32 %v130, %v132
    %v134 = vld [vmem:[%s5] sm:$0xff]
    %v135 = vadd.f32 %v134, %v133
    %136 = vst [vmem:[%s5] sm:$0xff] %v135
    // Predicated region
    $region30: #{_forward.1} parent=1 // pred_check
      _
    $region31: #{_forward.1} parent=1 // pred_check_branch
      %138 = sbr.rel (0) target = $region33
    $region32: #{_forward.1} parent=1 // pred_region
      _
    $region33: #{_forward.1} parent=1 // pred_fallthru
      _
    // Predicated region
    $region34: #{_forward.1} parent=1 // pred_check
      _
    $region35: #{_forward.1} parent=1 // pred_check_branch
      %140 = sbr.rel (0) target = $region37
    $region36: #{_forward.1} parent=1 // pred_region
      _
    $region37: #{_forward.1} parent=1 // pred_fallthru
      _
    %141 = vsyncpa [#allocation3], 1

</llo_original>
